<compile_context>
chip_gen: v7x
topology: tpu7x:2x2x1
jax: 0.10.0
libtpu: 0.0.40
codegen_flags: <defaults>
</compile_context>

<pallas_src>
import functools

import jax
import jax.numpy as jnp
from jax.experimental import pallas as pl
from jax.experimental.pallas import tpu as pltpu

HIDDEN = 128
A_PAD = 128        # pad num_actions to a full lane width for a lane-dense store
SUB_ALIGN = 16     # sublane alignment that is clean for both f32 (8) and bf16 (16)


def _round_up(n, m):
    return (n + m - 1) // m * m


def nrowan_dqn_kernel(x_ref, w_ref, b_ref, out_ref, *, k_pad):
    """One batch tile of the 3-layer MLP.

    x_ref:   (TB, K_pad)              matmul dtype (f32 or bf16)
    w_ref:   (K_pad + 256, 128)       fused [w1 | w2 | w3_eff], matmul dtype
    b_ref:   (8, 128) f32             row0=b1, row1=b2, row2=b3_eff
    out_ref: (TB, A_PAD) f32
    """
    x = x_ref[...]
    b = b_ref[...]
    b1 = b[0:1, :]
    b2 = b[1:2, :]
    b3 = b[2:3, :]

    # Static, 16-row-aligned slices of the fused weight buffer (zero-cost views).
    w1 = w_ref[0:k_pad, :]
    w2 = w_ref[k_pad:k_pad + HIDDEN, :]
    w3 = w_ref[k_pad + HIDDEN:k_pad + 2 * HIDDEN, :]

    mdt = x.dtype

    # fc1 + ReLU (accumulate in f32, bias-add/ReLU in f32)
    h1 = jnp.maximum(jnp.dot(x, w1, preferred_element_type=jnp.float32) + b1, 0.0)
    # fc2 + ReLU
    h2 = jnp.maximum(
        jnp.dot(h1.astype(mdt), w2, preferred_element_type=jnp.float32) + b2, 0.0)
    # NoisyLinear with pre-combined effective weight / bias
    out_ref[...] = (
        jnp.dot(h2.astype(mdt), w3, preferred_element_type=jnp.float32) + b3)


def pack_params(params, num_inputs, num_actions, matmul_dtype=jnp.float32):
    """One-time (per noise resample) packing into DMA-friendly buffers."""
    K_pad = _round_up(max(num_inputs, 1), SUB_ALIGN)
    assert num_actions <= A_PAD, "raise A_PAD for wider action spaces"

    # Pre-combine the noisy layer once per resample (wrapper-side, not per tile).
    w3_eff = params["w3_mu"] + params["w3_sigma"] * params["w3_eps"]   # (128, A)
    b3_eff = params["b3_mu"] + params["b3_sigma"] * params["b3_eps"]   # (1, A)

    # Fused weight buffer: rows [0:K_pad]=w1 (zero-padded input rows),
    # [K_pad:K_pad+128]=w2, [K_pad+128:K_pad+256]=w3_eff (zero-padded columns).
    w = jnp.zeros((K_pad + 2 * HIDDEN, HIDDEN), jnp.float32)
    w = w.at[:num_inputs, :].set(params["w1"])
    w = w.at[K_pad:K_pad + HIDDEN, :].set(params["w2"])
    w = w.at[K_pad + HIDDEN:K_pad + 2 * HIDDEN, :num_actions].set(w3_eff)
    w = w.astype(matmul_dtype)

    # Single (8,128) f32 bias vreg: row0=b1, row1=b2, row2=b3_eff, rest zero.
    b = jnp.zeros((8, HIDDEN), jnp.float32)
    b = b.at[0, :].set(params["b1"][0])
    b = b.at[1, :].set(params["b2"][0])
    b = b.at[2, :num_actions].set(b3_eff[0])

    return dict(w=w, b=b, K_pad=K_pad, A=num_actions)


def nrowan_dqn_forward(x, packed):
    B, K = x.shape
    K_pad = packed["K_pad"]
    A = packed["A"]
    mdt = packed["w"].dtype

    # Only the feature dim needs zero-padding; batch is padded just to the
    # sublane alignment (no full tile-multiple copy) and the grid is ragged.
    B_al = _round_up(max(B, 1), SUB_ALIGN)
    x_p = jnp.zeros((B_al, K_pad), mdt).at[:B, :K].set(x.astype(mdt))

    # Batch tiling: one tile for small batches (acting path); for large replay
    # batches use 512-1024 row tiles and at least 2 tiles (both v7x TCs busy).
    if B_al <= 512:
        TB = B_al
    else:
        TB = min(1024, _round_up(pl.cdiv(B_al, 2), SUB_ALIGN))
    n_tiles = pl.cdiv(B_al, TB)

    flops = 2 * B_al * (K_pad * HIDDEN + HIDDEN * HIDDEN + HIDDEN * A_PAD)
    bytes_accessed = (
        x_p.size * x_p.dtype.itemsize
        + packed["w"].size * packed["w"].dtype.itemsize
        + packed["b"].size * 4
        + B_al * A_PAD * 4)

    out = pl.pallas_call(
        functools.partial(nrowan_dqn_kernel, k_pad=K_pad),
        out_shape=jax.ShapeDtypeStruct((B_al, A_PAD), jnp.float32),
        grid=(n_tiles,),
        in_specs=[
            pl.BlockSpec((TB, K_pad), lambda i: (i, 0)),                    # x
            pl.BlockSpec((K_pad + 2 * HIDDEN, HIDDEN), lambda i: (0, 0)),   # fused W
            pl.BlockSpec((8, HIDDEN), lambda i: (0, 0)),                    # biases
        ],
        out_specs=pl.BlockSpec((TB, A_PAD), lambda i: (i, 0)),
        compiler_params=pltpu.CompilerParams(
            dimension_semantics=("parallel",)),
        cost_estimate=pl.CostEstimate(
            flops=flops, transcendentals=0, bytes_accessed=bytes_accessed),
    )(x_p, packed["w"], packed["b"])

    # TODO(synk): on v5e with huge replay batches, storing the output bf16 or
    # transposed (A, B) would cut the 128/A x padded HBM writeback.
    return out[:B, :A]


def init_params(key, num_inputs, num_actions):
    """Deterministic parameter init mirroring the PyTorch module's shapes."""
    ks = jax.random.split(key, 10)

    def linear_init(kw, kb, fan_in, fan_out):
        # PyTorch nn.Linear default: U(-1/sqrt(fan_in), 1/sqrt(fan_in))
        bound = 1.0 / jnp.sqrt(jnp.float32(fan_in))
        w = jax.random.uniform(kw, (fan_in, fan_out), jnp.float32, -bound, bound)
        b = jax.random.uniform(kb, (1, fan_out), jnp.float32, -bound, bound)
        return w, b

    w1, b1 = linear_init(ks[0], ks[1], num_inputs, HIDDEN)
    w2, b2 = linear_init(ks[2], ks[3], HIDDEN, HIDDEN)

    # NoisyLinear(128, num_actions): factorized Gaussian noise parameterization
    fan_in = HIDDEN
    mu_range = 1.0 / jnp.sqrt(jnp.float32(fan_in))
    sigma_init = 0.5 / jnp.sqrt(jnp.float32(fan_in))
    w3_mu = jax.random.uniform(ks[4], (fan_in, num_actions), jnp.float32,
                               -mu_range, mu_range)
    b3_mu = jax.random.uniform(ks[5], (1, num_actions), jnp.float32,
                               -mu_range, mu_range)
    w3_sigma = jnp.full((fan_in, num_actions), sigma_init, jnp.float32)
    b3_sigma = jnp.full((1, num_actions), sigma_init, jnp.float32)

    # Factorized noise: eps_w = f(eps_out) outer f(eps_in), eps_b = f(eps_out)
    def f(e):
        return jnp.sign(e) * jnp.sqrt(jnp.abs(e))

    eps_in = f(jax.random.normal(ks[6], (fan_in,), jnp.float32))
    eps_out = f(jax.random.normal(ks[7], (num_actions,), jnp.float32))
    w3_eps = eps_in[:, None] * eps_out[None, :]            # (fan_in, num_actions)
    b3_eps = eps_out[None, :]                               # (1, num_actions)

    # TODO(synk): act()'s exploration-noise add/clip, noise-scale decay,
    # reset_noise() and sigma_loss() are caller-side concerns (the caller
    # regenerates eps and re-runs pack_params per resample).
    return dict(
        w1=w1, b1=b1, w2=w2, b2=b2,
        w3_mu=w3_mu, w3_sigma=w3_sigma, w3_eps=w3_eps,
        b3_mu=b3_mu, b3_sigma=b3_sigma, b3_eps=b3_eps,
    )


def reference_forward(x, p):
    h1 = jnp.maximum(x @ p["w1"] + p["b1"], 0.0)
    h2 = jnp.maximum(h1 @ p["w2"] + p["b2"], 0.0)
    w3 = p["w3_mu"] + p["w3_sigma"] * p["w3_eps"]
    b3 = p["b3_mu"] + p["b3_sigma"] * p["b3_eps"]
    return h2 @ w3 + b3


if __name__ == "__main__":
    # Pendulum-like sizes: 3-dim observation, 1-dim action, small acting batch.
    num_inputs, num_actions, batch = 3, 1, 2

    key = jax.random.PRNGKey(0)
    k_params, k_x = jax.random.split(key)
    params = init_params(k_params, num_inputs, num_actions)
    packed = pack_params(params, num_inputs, num_actions)
    x = jax.random.normal(k_x, (batch, num_inputs), jnp.float32)

    out = jax.block_until_ready(nrowan_dqn_forward(x, packed))
    ref = reference_forward(x, params)
    assert out.shape == (batch, num_actions)
    assert jnp.allclose(out, ref, atol=1e-5, rtol=1e-5), (out, ref)

    # Larger replay batch: exercises the multi-tile ragged grid path.
    xb = jax.random.normal(jax.random.PRNGKey(1), (1200, num_inputs), jnp.float32)
    outb = jax.block_until_ready(nrowan_dqn_forward(xb, packed))
    refb = reference_forward(xb, params)
    assert outb.shape == (1200, num_actions)
    assert jnp.allclose(outb, refb, atol=1e-5, rtol=1e-5)

    # bf16 matmul-operand option (v6e/v7x training path): loose tolerance check.
    packed_bf16 = pack_params(params, num_inputs, num_actions,
                              matmul_dtype=jnp.bfloat16)
    outh = jax.block_until_ready(nrowan_dqn_forward(xb, packed_bf16))
    assert outh.shape == (1200, num_actions)
    assert jnp.all(jnp.isfinite(outh))
    assert jnp.allclose(outh, refb, atol=1e-1, rtol=1e-1)

    print("KERNEL_OK")
</pallas_src>

<mosaic_0001>
module attributes {stable_mosaic.version = 11 : i64} {
  func.func @nrowan_dqn_kernel(%arg0: i32, %arg1: memref<16x16xf32, #tpu.memory_space<vmem>>, %arg2: memref<272x128xf32, #tpu.memory_space<vmem>>, %arg3: memref<8x128xf32, #tpu.memory_space<vmem>>, %arg4: memref<16x128xf32, #tpu.memory_space<vmem>>) attributes {dimension_semantics = [#tpu.dimension_semantics<parallel>], iteration_bounds = array<i64: 1>, scalar_prefetch = 0 : i64, scratch_operands = 0 : i64, tpu.core_type = #tpu.core_type<tc>, window_params = [{transform_indices = @transform_0, window_bounds = array<i64: 16, 16>}, {pipeline_mode = #tpu.pipeline_mode<synchronous>, transform_indices = @transform_1, window_bounds = array<i64: 272, 128>}, {pipeline_mode = #tpu.pipeline_mode<synchronous>, transform_indices = @transform_2, window_bounds = array<i64: 8, 128>}, {transform_indices = @transform_3, window_bounds = array<i64: 16, 128>}]} {
    %c0 = arith.constant 0 : index
    %c0_0 = arith.constant 0 : index
    %0 = vector.load %arg1[%c0, %c0_0] : memref<16x16xf32, #tpu.memory_space<vmem>>, vector<16x16xf32>
    %c0_1 = arith.constant 0 : index
    %c0_2 = arith.constant 0 : index
    %1 = vector.load %arg3[%c0_1, %c0_2] : memref<8x128xf32, #tpu.memory_space<vmem>>, vector<8x128xf32>
    %2 = vector.extract_strided_slice %1 {offsets = [0, 0], sizes = [1, 128], strides = [1, 1]} : vector<8x128xf32> to vector<1x128xf32>
    %3 = vector.extract_strided_slice %1 {offsets = [1, 0], sizes = [1, 128], strides = [1, 1]} : vector<8x128xf32> to vector<1x128xf32>
    %4 = vector.extract_strided_slice %1 {offsets = [2, 0], sizes = [1, 128], strides = [1, 1]} : vector<8x128xf32> to vector<1x128xf32>
    %c0_3 = arith.constant 0 : index
    %c0_4 = arith.constant 0 : index
    %5 = vector.load %arg2[%c0_3, %c0_4] : memref<272x128xf32, #tpu.memory_space<vmem>>, vector<16x128xf32>
    %c16 = arith.constant 16 : index
    %c0_5 = arith.constant 0 : index
    %6 = vector.load %arg2[%c16, %c0_5] : memref<272x128xf32, #tpu.memory_space<vmem>>, vector<128x128xf32>
    %c144 = arith.constant 144 : index
    %c0_6 = arith.constant 0 : index
    %7 = vector.load %arg2[%c144, %c0_6] : memref<272x128xf32, #tpu.memory_space<vmem>>, vector<128x128xf32>
    %cst = arith.constant dense<0.000000e+00> : vector<16x128xf32>
    %8 = tpu.matmul %0, %5, %cst {dimension_numbers = #tpu.dot_dimension_numbers<[1], [0], [0], [1], [0, 0, 1, 1], [], []>} : vector<16x16xf32>, vector<16x128xf32>, vector<16x128xf32> -> vector<16x128xf32>
    %9 = vector.broadcast %2 : vector<1x128xf32> to vector<16x128xf32>
    %10 = arith.addf %8, %9 : vector<16x128xf32>
    %cst_7 = arith.constant 0.000000e+00 : f32
    %11 = vector.broadcast %cst_7 : f32 to vector<16x128xf32>
    %12 = arith.maximumf %10, %11 : vector<16x128xf32>
    %cst_8 = arith.constant dense<0.000000e+00> : vector<16x128xf32>
    %13 = tpu.matmul %12, %6, %cst_8 {dimension_numbers = #tpu.dot_dimension_numbers<[1], [0], [0], [1], [0, 0, 1, 1], [], []>} : vector<16x128xf32>, vector<128x128xf32>, vector<16x128xf32> -> vector<16x128xf32>
    %14 = vector.broadcast %3 : vector<1x128xf32> to vector<16x128xf32>
    %15 = arith.addf %13, %14 : vector<16x128xf32>
    %cst_9 = arith.constant 0.000000e+00 : f32
    %16 = vector.broadcast %cst_9 : f32 to vector<16x128xf32>
    %17 = arith.maximumf %15, %16 : vector<16x128xf32>
    %cst_10 = arith.constant dense<0.000000e+00> : vector<16x128xf32>
    %18 = tpu.matmul %17, %7, %cst_10 {dimension_numbers = #tpu.dot_dimension_numbers<[1], [0], [0], [1], [0, 0, 1, 1], [], []>} : vector<16x128xf32>, vector<128x128xf32>, vector<16x128xf32> -> vector<16x128xf32>
    %19 = vector.broadcast %4 : vector<1x128xf32> to vector<16x128xf32>
    %20 = arith.addf %18, %19 : vector<16x128xf32>
    %c0_11 = arith.constant 0 : index
    %c0_12 = arith.constant 0 : index
    %21 = vector.load %arg4[%c0_11, %c0_12] : memref<16x128xf32, #tpu.memory_space<vmem>>, vector<16x128xf32>
    tpu.vector_store %arg4[%c0_11, %c0_12], %20 {strides = array<i32>} : memref<16x128xf32, #tpu.memory_space<vmem>>, vector<16x128xf32>,
    return
  }
  func.func @transform_0(%arg0: i32) -> (i32, i32) {
    %c0_i32 = arith.constant 0 : i32
    %c0_i32_0 = arith.constant 0 : i32
    return %arg0, %c0_i32 : i32, i32
  }
  func.func @transform_1(%arg0: i32) -> (i32, i32) {
    %c0_i32 = arith.constant 0 : i32
    %c0_i32_0 = arith.constant 0 : i32
    %c0_i32_1 = arith.constant 0 : i32
    return %c0_i32, %c0_i32_0 : i32, i32
  }
  func.func @transform_2(%arg0: i32) -> (i32, i32) {
    %c0_i32 = arith.constant 0 : i32
    %c0_i32_0 = arith.constant 0 : i32
    %c0_i32_1 = arith.constant 0 : i32
    return %c0_i32, %c0_i32_0 : i32, i32
  }
  func.func @transform_3(%arg0: i32) -> (i32, i32) {
    %c0_i32 = arith.constant 0 : i32
    %c0_i32_0 = arith.constant 0 : i32
    return %arg0, %c0_i32 : i32, i32
  }
}

</mosaic_0001>

<llo_original>
// kernel: tpu_custom_call.1
$region0: #{tpu_custom_call.1}
  #allocation0 [shape = 'u32[]', space=smem, size = 0x4, offset = 0x4, fixed_abs, tag = 'smem constant byte address 0x4 - core index']
  #allocation1 [shape = 'u32[144,128]{1,0:T(1,128)}', space=vmem, size = 0x12000, scoped, tag = 'internal scratch']
  %s0 = inlined_call_operand.hbm [shape: f32[16,16], index: 0, kind: input, shape index: {}]
  %s1 = inlined_call_operand.hbm [shape: f32[272,128], index: 1, kind: input, shape index: {}]
  %s2 = inlined_call_operand.hbm [shape: f32[8,128], index: 2, kind: input, shape index: {}]
  %s3 = inlined_call_operand.hbm [shape: f32[16,128], index: 3, kind: output, shape index: {}]
  %s4 = sld [smem:[#allocation0]]
  $region34: #{tpu_custom_call.1} parent=0
    _
  %s6 = ssub.s32 1, %s4
  %s7 = scalar_select 0, %s6, %s4
  $region1: #{tpu_custom_call.1} parent=0
    #allocation2 [shape = 'u8[8192]{0}', space=vmem, size = 0x2000, scoped, tag = 'input window, operand 0, single buffered']
    #allocation3 [shape = 's32[1]{0}', space=sflag, size = 0x4, scoped, tag = 'scoped memory for tpu_custom_call.1']
    #allocation4 [shape = 's32[1]{0}', space=sflag, size = 0x4, scoped, tag = 'scoped memory for tpu_custom_call.1']
    #allocation5 [shape = 'u8[139264]{0}', space=vmem, size = 0x22000, scoped, tag = 'input window, operand 1, single buffered']
    #allocation6 [shape = 's32[1]{0}', space=sflag, size = 0x4, scoped, tag = 'scoped memory for tpu_custom_call.1']
    #allocation7 [shape = 'u8[4096]{0}', space=vmem, size = 0x1000, scoped, tag = 'input window, operand 2, single buffered']
    #allocation8 [shape = 'u8[8192]{0}', space=vmem, size = 0x2000, scoped, tag = 'output window, operand 0, single buffered']
    %8 = vsyncpa [#allocation3], 0
    %9 = vsyncpa [#allocation6], 0
    %10 = vsyncpa [#allocation4], 0
    // Predicated region
    $region2: #{tpu_custom_call.1} parent=1 // pred_check
      _
    $region3: #{tpu_custom_call.1} parent=1 // pred_check_branch
      %12 = sbr.rel (0) target = $region5
    $region4: #{tpu_custom_call.1} parent=1 // pred_region
      %s14 = ssub.s32 256, 256
      %15 = vsyncadd [#allocation3], %s14
      %s16 = sshll.u32 [#allocation2], 4
      %s17 = int_to_ptr.vmem [resolvable:$true] %s16
      %22 = dma.hbm_to_vmem [thread:$0]  %s0, 256, %s17, [#allocation3], 128, 128, 8
    $region5: #{tpu_custom_call.1} parent=1 // pred_fallthru
      _
    // Predicated region
    $region6: #{tpu_custom_call.1} parent=1 // pred_check
      _
    $region7: #{tpu_custom_call.1} parent=1 // pred_check_branch
      %24 = sbr.rel (0) target = $region9
    $region8: #{tpu_custom_call.1} parent=1 // pred_region
      %s26 = ssub.s32 4352, 4352
      %27 = vsyncadd [#allocation6], %s26
      %s28 = sshll.u32 [#allocation5], 4
      %s29 = int_to_ptr.vmem [resolvable:$true] %s28
      %34 = dma.hbm_to_vmem [thread:$0]  %s1, 4352, %s29, [#allocation6], 128, 128, 8
    $region9: #{tpu_custom_call.1} parent=1 // pred_fallthru
      _
    // Predicated region
    $region10: #{tpu_custom_call.1} parent=1 // pred_check
      _
    $region11: #{tpu_custom_call.1} parent=1 // pred_check_branch
      %36 = sbr.rel (0) target = $region13
    $region12: #{tpu_custom_call.1} parent=1 // pred_region
      %s38 = ssub.s32 128, 128
      %39 = vsyncadd [#allocation6], %s38
      %s41 = sshll.u32 [#allocation7], 4
      %s42 = int_to_ptr.vmem [resolvable:$true] %s41
      %44 = dma.hbm_to_vmem [thread:$0]  %s2, 128, %s42, [#allocation6]
    $region13: #{tpu_custom_call.1} parent=1 // pred_fallthru
      _
    // Predicated region
    $region14: #{tpu_custom_call.1} parent=1 // pred_check
      _
    $region15: #{tpu_custom_call.1} parent=1 // pred_check_branch
      %46 = sbr.rel (0) target = $region17
    $region16: #{tpu_custom_call.1} parent=1 // pred_region
      %47 = dma.done [#allocation3], 256
    $region17: #{tpu_custom_call.1} parent=1 // pred_fallthru
      _
    // Predicated region
    $region18: #{tpu_custom_call.1} parent=1 // pred_check
      _
    $region19: #{tpu_custom_call.1} parent=1 // pred_check_branch
      %49 = sbr.rel (0) target = $region21
    $region20: #{tpu_custom_call.1} parent=1 // pred_region
      %50 = dma.done [#allocation6], 4352
    $region21: #{tpu_custom_call.1} parent=1 // pred_fallthru
      _
    // Predicated region
    $region22: #{tpu_custom_call.1} parent=1 // pred_check
      _
    $region23: #{tpu_custom_call.1} parent=1 // pred_check_branch
      %52 = sbr.rel (0) target = $region25
    $region24: #{tpu_custom_call.1} parent=1 // pred_region
      %53 = dma.done [#allocation6], 128
    $region25: #{tpu_custom_call.1} parent=1 // pred_fallthru
      _
    %v54 = vld [vmem:[#allocation2] sm:$0xff]
    %v55 = vld [vmem:[#allocation2 + $0x8] sm:$0xff]
    %v56 = vld [vmem:[#allocation7] sm:$0xff]
    %v57 = vld [vmem:[#allocation5] sm:$0xff]
    %v58 = vld [vmem:[#allocation5 + $0x8] sm:$0xff]
    %v59 = vld [vmem:[#allocation5 + $0x10] sm:$0xff]
    %v60 = vld [vmem:[#allocation5 + $0x18] sm:$0xff]
    %v61 = vld [vmem:[#allocation5 + $0x20] sm:$0xff]
    %v62 = vld [vmem:[#allocation5 + $0x28] sm:$0xff]
    %v63 = vld [vmem:[#allocation5 + $0x30] sm:$0xff]
    %v64 = vld [vmem:[#allocation5 + $0x38] sm:$0xff]
    %v65 = vld [vmem:[#allocation5 + $0x40] sm:$0xff]
    %v66 = vld [vmem:[#allocation5 + $0x48] sm:$0xff]
    %v67 = vld [vmem:[#allocation5 + $0x50] sm:$0xff]
    %v68 = vld [vmem:[#allocation5 + $0x58] sm:$0xff]
    %v69 = vld [vmem:[#allocation5 + $0x60] sm:$0xff]
    %v70 = vld [vmem:[#allocation5 + $0x68] sm:$0xff]
    %v71 = vld [vmem:[#allocation5 + $0x70] sm:$0xff]
    %v72 = vld [vmem:[#allocation5 + $0x78] sm:$0xff]
    %v73 = vld [vmem:[#allocation5 + $0x80] sm:$0xff]
    %v74 = vld [vmem:[#allocation5 + $0x88] sm:$0xff]
    %v75 = vld [vmem:[#allocation5 + $0x90] sm:$0xff]
    %v76 = vld [vmem:[#allocation5 + $0x98] sm:$0xff]
    %v77 = vld [vmem:[#allocation5 + $0xa0] sm:$0xff]
    %v78 = vld [vmem:[#allocation5 + $0xa8] sm:$0xff]
    %v79 = vld [vmem:[#allocation5 + $0xb0] sm:$0xff]
    %v80 = vld [vmem:[#allocation5 + $0xb8] sm:$0xff]
    %v81 = vld [vmem:[#allocation5 + $0xc0] sm:$0xff]
    %v82 = vld [vmem:[#allocation5 + $0xc8] sm:$0xff]
    %v83 = vld [vmem:[#allocation5 + $0xd0] sm:$0xff]
    %v84 = vld [vmem:[#allocation5 + $0xd8] sm:$0xff]
    %v85 = vld [vmem:[#allocation5 + $0xe0] sm:$0xff]
    %v86 = vld [vmem:[#allocation5 + $0xe8] sm:$0xff]
    %v87 = vld [vmem:[#allocation5 + $0xf0] sm:$0xff]
    %v88 = vld [vmem:[#allocation5 + $0xf8] sm:$0xff]
    %v89 = vld [vmem:[#allocation5 + $0x100] sm:$0xff]
    %v90 = vld [vmem:[#allocation5 + $0x108] sm:$0xff]
    %v91 = vlaneseq
    %v92 = vshrl.u32 %v91, 7
    %v93 = vsub.s32 0, %v92
    %v94 = vrot.slane %v56, %v93
    %vm95 = vcmask 130048
    %v97 = vsel %vm95, %v54, 0
    %v100 = vsel %vm95, %v55, 0
    %102 = vmatprep.subr.mxu0 0.0
    %103 = vmatpush1.msra.mxu0 %v57
    %104 = vmatprep.subr.mxu0 0.0
    %105 = vmatpush1.msra.mxu0 %v58
    %106 = vmatprep.subr.mxu0 0.0
    %107 = vmatpush1.msra.mxu0 0.0
    %108 = vmatprep.subr.mxu0 0.0
    %109 = vmatpush1.msra.mxu0 0.0
    %110 = vmatprep.subr.mxu0 0.0
    %111 = vmatpush1.msra.mxu0 0.0
    %112 = vmatprep.subr.mxu0 0.0
    %113 = vmatpush1.msra.mxu0 0.0
    %114 = vmatprep.subr.mxu0 0.0
    %115 = vmatpush1.msra.mxu0 0.0
    %116 = vmatprep.subr.mxu0 0.0
    %117 = vmatpush1.msra.mxu0 0.0
    %118 = vmatprep.subr.mxu0 0.0
    %119 = vmatpush1.msra.mxu0 0.0
    %120 = vmatprep.subr.mxu0 0.0
    %121 = vmatpush1.msra.mxu0 0.0
    %122 = vmatprep.subr.mxu0 0.0
    %123 = vmatpush1.msra.mxu0 0.0
    %124 = vmatprep.subr.mxu0 0.0
    %125 = vmatpush1.msra.mxu0 0.0
    %126 = vmatprep.subr.mxu0 0.0
    %127 = vmatpush1.msra.mxu0 0.0
    %128 = vmatprep.subr.mxu0 0.0
    %129 = vmatpush1.msra.mxu0 0.0
    %130 = vmatprep.subr.mxu0 0.0
    %131 = vmatpush1.msra.mxu0 0.0
    %132 = vmatprep.subr.mxu0 0.0
    %133 = vmatpush1.msra.mxu0 0.0
    %134 = vmatprep.subr.mxu0 0.0
    %135 = vmatpush1.msra.mxu0 0.0
    %136 = vmatprep.subr.mxu0 0.0
    %137 = vmatpush1.msra.mxu0 0.0
    %138 = vmatprep.subr.mxu0 0.0
    %139 = vmatpush1.msra.mxu0 0.0
    %140 = vmatprep.subr.mxu0 0.0
    %141 = vmatpush1.msra.mxu0 0.0
    %142 = vmatprep.subr.mxu0 0.0
    %143 = vmatpush1.msra.mxu0 0.0
    %144 = vmatprep.subr.mxu0 0.0
    %145 = vmatpush1.msra.mxu0 0.0
    %146 = vmatprep.subr.mxu0 0.0
    %147 = vmatpush1.msra.mxu0 0.0
    %148 = vmatprep.subr.mxu0 0.0
    %149 = vmatpush1.msra.mxu0 0.0
    %150 = vmatprep.subr.mxu0 0.0
    %151 = vmatpush1.msra.mxu0 0.0
    %152 = vmatprep.subr.mxu0 0.0
    %153 = vmatpush1.msra.mxu0 0.0
    %154 = vmatprep.subr.mxu0 0.0
    %155 = vmatpush1.msra.mxu0 0.0
    %156 = vmatprep.subr.mxu0 0.0
    %157 = vmatpush1.msra.mxu0 0.0
    %158 = vmatprep.subr.mxu0 0.0
    %159 = vmatpush1.msra.mxu0 0.0
    %160 = vmatprep.subr.mxu0 0.0
    %161 = vmatpush1.msra.mxu0 0.0
    %162 = vmatprep.subr.mxu0 0.0
    %163 = vmatpush1.msra.mxu0 0.0
    %164 = vmatprep.subr.mxu0 0.0
    %165 = vmatpush1.msra.mxu0 0.0
    %166 = vmatprep.mubr.f32.mxu0 0.0
    %167 = vmatmul.mubr.f32.gmra.mrb[0].mxu0 %v97
    %v168 = vpop.f32.mrb[0].mxu0
    %v169 = vadd.f32 %v94, %v168
    %v170 = vpop.f32.mrb[0].mxu0
    %171 = vmatprep.mubr.f32.mxu0 0.0
    %172 = vmatmul.mubr.f32.gmra.mrb[0].mxu0 %v100
    %v173 = vpop.f32.mrb[0].mxu0
    %v174 = vadd.f32 %v94, %v173
    %v175 = vpop.f32.mrb[0].mxu0
    %176 = vdwg.mxu0
    %v177 = vmax.f32 %v169, 0.0
    %v178 = vmax.f32 %v174, 0.0
    %v179 = vlaneseq
    %v180 = vshrl.u32 %v179, 7
    %v181 = vsub.s32 1, %v180
    %v182 = vrot.slane %v56, %v181
    %183 = vmatprep.subr.mxu0 0.0
    %184 = vmatpush1.msra.mxu0 %v59
    %185 = vmatprep.subr.mxu0 0.0
    %186 = vmatpush1.msra.mxu0 %v60
    %187 = vmatprep.subr.mxu0 0.0
    %188 = vmatpush1.msra.mxu0 %v61
    %189 = vmatprep.subr.mxu0 0.0
    %190 = vmatpush1.msra.mxu0 %v62
    %191 = vmatprep.subr.mxu0 0.0
    %192 = vmatpush1.msra.mxu0 %v63
    %193 = vmatprep.subr.mxu0 0.0
    %194 = vmatpush1.msra.mxu0 %v64
    %195 = vmatprep.subr.mxu0 0.0
    %196 = vmatpush1.msra.mxu0 %v65
    %197 = vmatprep.subr.mxu0 0.0
    %198 = vmatpush1.msra.mxu0 %v66
    %199 = vmatprep.subr.mxu0 0.0
    %200 = vmatpush1.msra.mxu0 %v67
    %201 = vmatprep.subr.mxu0 0.0
    %202 = vmatpush1.msra.mxu0 %v68
    %203 = vmatprep.subr.mxu0 0.0
    %204 = vmatpush1.msra.mxu0 %v69
    %205 = vmatprep.subr.mxu0 0.0
    %206 = vmatpush1.msra.mxu0 %v70
    %207 = vmatprep.subr.mxu0 0.0
    %208 = vmatpush1.msra.mxu0 %v71
    %209 = vmatprep.subr.mxu0 0.0
    %210 = vmatpush1.msra.mxu0 %v72
    %211 = vmatprep.subr.mxu0 0.0
    %212 = vmatpush1.msra.mxu0 %v73
    %213 = vmatprep.subr.mxu0 0.0
    %214 = vmatpush1.msra.mxu0 %v74
    %215 = vmatprep.subr.mxu0 0.0
    %216 = vmatpush1.msra.mxu0 0.0
    %217 = vmatprep.subr.mxu0 0.0
    %218 = vmatpush1.msra.mxu0 0.0
    %219 = vmatprep.subr.mxu0 0.0
    %220 = vmatpush1.msra.mxu0 0.0
    %221 = vmatprep.subr.mxu0 0.0
    %222 = vmatpush1.msra.mxu0 0.0
    %223 = vmatprep.subr.mxu0 0.0
    %224 = vmatpush1.msra.mxu0 0.0
    %225 = vmatprep.subr.mxu0 0.0
    %226 = vmatpush1.msra.mxu0 0.0
    %227 = vmatprep.subr.mxu0 0.0
    %228 = vmatpush1.msra.mxu0 0.0
    %229 = vmatprep.subr.mxu0 0.0
    %230 = vmatpush1.msra.mxu0 0.0
    %231 = vmatprep.subr.mxu0 0.0
    %232 = vmatpush1.msra.mxu0 0.0
    %233 = vmatprep.subr.mxu0 0.0
    %234 = vmatpush1.msra.mxu0 0.0
    %235 = vmatprep.subr.mxu0 0.0
    %236 = vmatpush1.msra.mxu0 0.0
    %237 = vmatprep.subr.mxu0 0.0
    %238 = vmatpush1.msra.mxu0 0.0
    %239 = vmatprep.subr.mxu0 0.0
    %240 = vmatpush1.msra.mxu0 0.0
    %241 = vmatprep.subr.mxu0 0.0
    %242 = vmatpush1.msra.mxu0 0.0
    %243 = vmatprep.subr.mxu0 0.0
    %244 = vmatpush1.msra.mxu0 0.0
    %245 = vmatprep.subr.mxu0 0.0
    %246 = vmatpush1.msra.mxu0 0.0
    %247 = vmatprep.mubr.f32.mxu0 0.0
    %248 = vmatmul.mubr.f32.gmra.mrb[0].mxu0 %v177
    %v249 = vpop.f32.mrb[0].mxu0
    %v250 = vadd.f32 %v182, %v249
    %v251 = vpop.f32.mrb[0].mxu0
    %252 = vmatprep.mubr.f32.mxu0 0.0
    %253 = vmatmul.mubr.f32.gmra.mrb[0].mxu0 %v178
    %v254 = vpop.f32.mrb[0].mxu0
    %v255 = vadd.f32 %v182, %v254
    %v256 = vpop.f32.mrb[0].mxu0
    %257 = vdwg.mxu0
    %v258 = vmax.f32 %v250, 0.0
    %v259 = vmax.f32 %v255, 0.0
    %v260 = vlaneseq
    %v261 = vshrl.u32 %v260, 7
    %v262 = vsub.s32 2, %v261
    %v263 = vrot.slane %v56, %v262
    %264 = vmatprep.subr.mxu0 0.0
    %265 = vmatpush1.msra.mxu0 %v75
    %266 = vmatprep.subr.mxu0 0.0
    %267 = vmatpush1.msra.mxu0 %v76
    %268 = vmatprep.subr.mxu0 0.0
    %269 = vmatpush1.msra.mxu0 %v77
    %270 = vmatprep.subr.mxu0 0.0
    %271 = vmatpush1.msra.mxu0 %v78
    %272 = vmatprep.subr.mxu0 0.0
    %273 = vmatpush1.msra.mxu0 %v79
    %274 = vmatprep.subr.mxu0 0.0
    %275 = vmatpush1.msra.mxu0 %v80
    %276 = vmatprep.subr.mxu0 0.0
    %277 = vmatpush1.msra.mxu0 %v81
    %278 = vmatprep.subr.mxu0 0.0
    %279 = vmatpush1.msra.mxu0 %v82
    %280 = vmatprep.subr.mxu0 0.0
    %281 = vmatpush1.msra.mxu0 %v83
    %282 = vmatprep.subr.mxu0 0.0
    %283 = vmatpush1.msra.mxu0 %v84
    %284 = vmatprep.subr.mxu0 0.0
    %285 = vmatpush1.msra.mxu0 %v85
    %286 = vmatprep.subr.mxu0 0.0
    %287 = vmatpush1.msra.mxu0 %v86
    %288 = vmatprep.subr.mxu0 0.0
    %289 = vmatpush1.msra.mxu0 %v87
    %290 = vmatprep.subr.mxu0 0.0
    %291 = vmatpush1.msra.mxu0 %v88
    %292 = vmatprep.subr.mxu0 0.0
    %293 = vmatpush1.msra.mxu0 %v89
    %294 = vmatprep.subr.mxu0 0.0
    %295 = vmatpush1.msra.mxu0 %v90
    %296 = vmatprep.subr.mxu0 0.0
    %297 = vmatpush1.msra.mxu0 0.0
    %298 = vmatprep.subr.mxu0 0.0
    %299 = vmatpush1.msra.mxu0 0.0
    %300 = vmatprep.subr.mxu0 0.0
    %301 = vmatpush1.msra.mxu0 0.0
    %302 = vmatprep.subr.mxu0 0.0
    %303 = vmatpush1.msra.mxu0 0.0
    %304 = vmatprep.subr.mxu0 0.0
    %305 = vmatpush1.msra.mxu0 0.0
    %306 = vmatprep.subr.mxu0 0.0
    %307 = vmatpush1.msra.mxu0 0.0
    %308 = vmatprep.subr.mxu0 0.0
    %309 = vmatpush1.msra.mxu0 0.0
    %310 = vmatprep.subr.mxu0 0.0
    %311 = vmatpush1.msra.mxu0 0.0
    %312 = vmatprep.subr.mxu0 0.0
    %313 = vmatpush1.msra.mxu0 0.0
    %314 = vmatprep.subr.mxu0 0.0
    %315 = vmatpush1.msra.mxu0 0.0
    %316 = vmatprep.subr.mxu0 0.0
    %317 = vmatpush1.msra.mxu0 0.0
    %318 = vmatprep.subr.mxu0 0.0
    %319 = vmatpush1.msra.mxu0 0.0
    %320 = vmatprep.subr.mxu0 0.0
    %321 = vmatpush1.msra.mxu0 0.0
    %322 = vmatprep.subr.mxu0 0.0
    %323 = vmatpush1.msra.mxu0 0.0
    %324 = vmatprep.subr.mxu0 0.0
    %325 = vmatpush1.msra.mxu0 0.0
    %326 = vmatprep.subr.mxu0 0.0
    %327 = vmatpush1.msra.mxu0 0.0
    %328 = vmatprep.mubr.f32.mxu0 0.0
    %329 = vmatmul.mubr.f32.gmra.mrb[0].mxu0 %v258
    %v330 = vpop.f32.mrb[0].mxu0
    %v331 = vadd.f32 %v263, %v330
    %v332 = vpop.f32.mrb[0].mxu0
    %333 = vmatprep.mubr.f32.mxu0 0.0
    %334 = vmatmul.mubr.f32.gmra.mrb[0].mxu0 %v259
    %v335 = vpop.f32.mrb[0].mxu0
    %v336 = vadd.f32 %v263, %v335
    %v337 = vpop.f32.mrb[0].mxu0
    %338 = vdwg.mxu0
    %339 = vst [vmem:[#allocation8] sm:$0xff] %v331
    %340 = vst [vmem:[#allocation8 + $0x8] sm:$0xff] %v336
    // Predicated region
    $region26: #{tpu_custom_call.1} parent=1 // pred_check
      _
    $region27: #{tpu_custom_call.1} parent=1 // pred_check_branch
      %342 = sbr.rel (0) target = $region29
    $region28: #{tpu_custom_call.1} parent=1 // pred_region
      %s344 = ssub.s32 256, 256
      %345 = vsyncadd [#allocation4], %s344
      %s346 = sshll.u32 [#allocation8], 4
      %s347 = int_to_ptr.vmem [resolvable:$true] %s346
      %352 = dma.vmem_to_hbm [thread:$0]  %s347, 256, %s3, [#allocation4], 128, 128, 8
    $region29: #{tpu_custom_call.1} parent=1 // pred_fallthru
      _
    // Predicated region
    $region30: #{tpu_custom_call.1} parent=1 // pred_check
      _
    $region31: #{tpu_custom_call.1} parent=1 // pred_check_branch
      %354 = sbr.rel (0) target = $region33
    $region32: #{tpu_custom_call.1} parent=1 // pred_region
      %355 = dma.done [#allocation4], 256
    $region33: #{tpu_custom_call.1} parent=1 // pred_fallthru
      _
    %356 = vsyncpa [#allocation3], 1
    %357 = vsyncpa [#allocation6], 1
    %358 = vsyncpa [#allocation4], 1

</llo_original>
